<compile_context>
chip_gen: v5e
topology: v5e:2x2
jax: 0.10.0
libtpu: 0.0.40
codegen_flags: <defaults>
</compile_context>

<pallas_src>
from functools import partial

import jax
import jax.numpy as jnp
from jax.experimental import pallas as pl
from jax.experimental.pallas import tpu as pltpu

_SUBLANE = 8                          # f32 sublane packing
_LANE = 128
_MXU_TILE = 256                       # MXU-friendly row granularity (2x128 on v5e)
_MAX_TILE_N = 1024                    # 512-1024 rows ~ HBM-roofline sweet spot


def _round_up(x, m):
    return (x + m - 1) // m * m


def _vmem_plan():
    """Generation-aware (plan_budget, vmem_limit) in bytes."""
    cap = 64 * 1024 * 1024            # conservative default = v7x per-TC VMEM
    try:
        info = pltpu.get_tpu_info()
        cap = int(getattr(info, "vmem_capacity_bytes", cap))
    except Exception:
        pass
    limit = min(int(cap * 0.78), 100 * 1024 * 1024)   # 128MiB part -> ~100MiB
    budget = int(limit * 0.85)                        # headroom for the plan
    return budget, limit


# ------------------------------------------------------------------ kernels --
def _residual_kernel(x_ref, w_ref, b_ref, o_ref):
    """One (TILE_N, H) row tile: out = (x + x @ W + b) / 255; W/b VMEM-resident."""
    x = x_ref[...]                                               # [tn, H] f32
    sub = jnp.dot(x, w_ref[...], preferred_element_type=jnp.float32)
    # dropout(p=0) is identity; Simple_LayerNorm is x / 255.0 (fused multiply).
    o_ref[...] = ((x + sub + b_ref[...]) * (1.0 / 255.0)).astype(o_ref.dtype)


def _residual_kernel_ktiled(tile_k, x_ref, w_ref, b_ref, o_ref, acc_ref):
    """Large-H fallback: accumulate x @ W over the K grid axis in f32 scratch.

    x is read once per row tile (K-slabs); the residual add for this slab's
    columns is folded into the accumulator (W is square: H x H).
    """
    k = pl.program_id(1)

    @pl.when(k == 0)
    def _():
        acc_ref[...] = jnp.zeros_like(acc_ref)

    x = x_ref[...]                                               # [tn, tk]
    acc_ref[...] += jnp.dot(x, w_ref[...], preferred_element_type=jnp.float32)
    # Residual contribution for columns [k*tk, (k+1)*tk) — lane-aligned slice.
    col0 = pl.multiple_of(k * tile_k, _LANE)
    acc_ref[:, pl.ds(col0, tile_k)] += x

    @pl.when(k == pl.num_programs(1) - 1)
    def _():
        out = (acc_ref[...] + b_ref[...]) * (1.0 / 255.0)
        o_ref[...] = out.astype(o_ref.dtype)


# ------------------------------------------------------------- tile planning --
def _pick_tile_n(n, resident_bytes, per_row_bytes, budget):
    avail = max(budget - resident_bytes, _SUBLANE * per_row_bytes)
    tile = avail // per_row_bytes
    tile = min(int(tile), _MAX_TILE_N, _round_up(n, _SUBLANE))
    gran = _MXU_TILE if tile >= _MXU_TILE else _SUBLANE
    tile = max(_SUBLANE, tile // gran * gran)
    # Keep >= 4 row-grid steps when rows allow it so both v7x TensorCores get
    # work (near-free on single-TC v5e/v6e: per-step overhead ~0.35us).
    if n >= 4 * gran:
        tile = min(tile, _round_up(pl.cdiv(n, 4), gran))
    # Prefer a tile that divides N evenly (no padded/ragged last MXU pass),
    # as long as it does not shrink the tile by more than 2x.
    if n % tile:
        cand = tile - gran
        while cand >= max(gran, tile // 2):
            if n % cand == 0:
                tile = cand
                break
            cand -= gran
    return int(tile)


def _pick_tile_k(h, budget):
    """Largest multiple-of-128 divisor of H whose double-buffered W slab uses
    at most half the planning budget (None if H is not a multiple of 128)."""
    if h % _LANE:
        return None
    best = None
    for d in range(_LANE, h + 1, _LANE):
        if h % d == 0 and 2 * d * h * 4 <= budget // 2:
            best = d
    return best


# ------------------------------------------------------------------ wrapper --
def residual_connection(x, w, b):
    """x: [..., H] float32; w: [H, H]; b: [H]."""
    orig_shape = x.shape
    H = orig_shape[-1]
    x2 = x.reshape(-1, H)                                        # [N, H]
    N = x2.shape[0]

    # Small-H dispatch: H < 128 means a lane-sparse output slab (masked partial
    # vst on every store) and a sub-lane MXU contraction — fused XLA wins.
    if H < _LANE or N == 0:
        out = (x + jnp.einsum("...h,hk->...k", x, w) + b) * (1.0 / 255.0)
        return out.astype(x.dtype)

    budget, vmem_limit = _vmem_plan()
    b2 = b.reshape(1, H)

    # Fast path residency: W + b single-buffered (constant index_map + Buffered(1)).
    resident_fast = H * H * 4 + H * 4
    # Streamed bytes per row: x + out double-buffered (16*H) + f32 matmul temps (~8*H).
    per_row_fast = 24 * H

    if resident_fast + _SUBLANE * per_row_fast <= budget:
        # Fast path: W and b stay VMEM-resident; stream row tiles of x / out.
        tile_n = _pick_tile_n(N, resident_fast, per_row_fast, budget)
        grid = (pl.cdiv(N, tile_n),)
        cost = pl.CostEstimate(
            flops=2 * N * H * H + 3 * N * H,
            transcendentals=0,
            bytes_accessed=4 * (2 * N * H + H * H + H),
        )
        out = pl.pallas_call(
            _residual_kernel,
            out_shape=jax.ShapeDtypeStruct((N, H), x.dtype),
            grid_spec=pltpu.PrefetchScalarGridSpec(
                num_scalar_prefetch=0,
                grid=grid,
                in_specs=[
                    pl.BlockSpec((tile_n, H), lambda i: (i, 0)),   # x row tile
                    pl.BlockSpec((H, H), lambda i: (0, 0),         # W (resident, 1-buf)
                                 pipeline_mode=pl.Buffered(1)),
                    pl.BlockSpec((1, H), lambda i: (0, 0),         # b (resident, 1-buf)
                                 pipeline_mode=pl.Buffered(1)),
                ],
                out_specs=pl.BlockSpec((tile_n, H), lambda i: (i, 0)),
            ),
            compiler_params=pltpu.CompilerParams(
                dimension_semantics=("parallel",),   # v7x: shard rows across 2 TCs
                vmem_limit_bytes=vmem_limit,
            ),
            cost_estimate=cost,
        )(x2, w, b2)
        return out.reshape(orig_shape)

    # Large-H fallback: tile the contraction (K) axis with an f32 accumulator.
    tile_k = _pick_tile_k(H, budget)
    if tile_k is None:
        # TODO(synk): huge H that is not a multiple of 128 has no clean K-tiled
        # Pallas plan here; defer to fused XLA rather than fake a layout.
        out = (x + jnp.einsum("...h,hk->...k", x, w) + b) * (1.0 / 255.0)
        return out.astype(x.dtype)

    resident = 2 * tile_k * H * 4 + H * 4            # W K-slab (2-buf) + b (1-buf)
    per_row = 8 * tile_k + 20 * H                    # x slab (2x) + out (2x) + acc + temps
    tile_n = _pick_tile_n(N, resident, per_row, budget)
    n_row_tiles = pl.cdiv(N, tile_n)
    grid = (n_row_tiles, H // tile_k)
    cost = pl.CostEstimate(
        flops=2 * N * H * H + 3 * N * H,
        transcendentals=0,
        # W is re-streamed once per row tile in this regime; x/out read/written once.
        bytes_accessed=4 * (2 * N * H + H * H * n_row_tiles + H * n_row_tiles),
    )
    out = pl.pallas_call(
        partial(_residual_kernel_ktiled, tile_k),
        out_shape=jax.ShapeDtypeStruct((N, H), x.dtype),
        grid_spec=pltpu.PrefetchScalarGridSpec(
            num_scalar_prefetch=0,
            grid=grid,
            in_specs=[
                pl.BlockSpec((tile_n, tile_k), lambda i, k: (i, k)),   # x K-slab
                pl.BlockSpec((tile_k, H), lambda i, k: (k, 0)),        # W K-slab
                pl.BlockSpec((1, H), lambda i, k: (0, 0),              # b (resident)
                             pipeline_mode=pl.Buffered(1)),
            ],
            out_specs=pl.BlockSpec((tile_n, H), lambda i, k: (i, 0)),
            scratch_shapes=[pltpu.VMEM((tile_n, H), jnp.float32)],
        ),
        compiler_params=pltpu.CompilerParams(
            dimension_semantics=("parallel", "arbitrary"),
            vmem_limit_bytes=vmem_limit,
        ),
        cost_estimate=cost,
    )(x2, w, b2)
    return out.reshape(orig_shape)


def residual_connection_ref(x, w, b):
    """Pure-JAX reference matching the PyTorch module (f32-accurate matmul)."""
    sub = jnp.einsum("...h,hk->...k", x, w,
                     precision=jax.lax.Precision.HIGHEST) + b    # sublayer(x)
    return (x + sub) / 255.0                                     # norm(x + dropout(sub))


if __name__ == "__main__":
    key = jax.random.PRNGKey(0)

    def make_case(k, shape):
        kx, kw, kb = jax.random.split(k, 3)
        H = shape[-1]
        x = jax.random.normal(kx, shape, dtype=jnp.float32)
        w = jax.random.normal(kw, (H, H), dtype=jnp.float32) * 0.05
        b = jax.random.normal(kb, (H,), dtype=jnp.float32) * 0.01
        return x, w, b

    k1, k2, k3 = jax.random.split(key, 3)

    # 1) Lane-dense small case -> Pallas fast path (single row tile).
    x, w, b = make_case(k1, (2, 8, 128))
    out = jax.block_until_ready(residual_connection(x, w, b))
    assert out.shape == x.shape
    assert jnp.allclose(out, residual_connection_ref(x, w, b), atol=1e-5, rtol=1e-5)

    # 2) Larger case -> Pallas fast path with a multi-step (pipelined) row grid.
    x, w, b = make_case(k2, (4, 256, 256))
    out = jax.block_until_ready(residual_connection(x, w, b))
    assert out.shape == x.shape
    assert jnp.allclose(out, residual_connection_ref(x, w, b), atol=2e-5, rtol=1e-5)

    # 3) Lane-sparse H=32 case -> small-H dispatch (fused XLA path).
    x, w, b = make_case(k3, (2, 8, 32))
    out = jax.block_until_ready(residual_connection(x, w, b))
    assert out.shape == x.shape
    assert jnp.allclose(out, residual_connection_ref(x, w, b), atol=1e-5, rtol=1e-5)

    print("KERNEL_OK")
</pallas_src>

<mosaic_0001>
module attributes {stable_mosaic.version = 11 : i64} {
  func.func @_residual_kernel(%arg0: i32, %arg1: memref<16x128xf32, #tpu.memory_space<vmem>>, %arg2: memref<128x128xf32, #tpu.memory_space<vmem>>, %arg3: memref<1x128xf32, #tpu.memory_space<vmem>>, %arg4: memref<16x128xf32, #tpu.memory_space<vmem>>) attributes {dimension_semantics = [#tpu.dimension_semantics<parallel>], iteration_bounds = array<i64: 1>, scalar_prefetch = 0 : i64, scratch_operands = 0 : i64, tpu.core_type = #tpu.core_type<tc>, window_params = [{transform_indices = @transform_0, window_bounds = array<i64: 16, 128>}, {pipeline_mode = #tpu.pipeline_mode<synchronous>, transform_indices = @transform_1, window_bounds = array<i64: 128, 128>}, {pipeline_mode = #tpu.pipeline_mode<synchronous>, transform_indices = @transform_2, window_bounds = array<i64: 1, 128>}, {transform_indices = @transform_3, window_bounds = array<i64: 16, 128>}]} {
    %c0 = arith.constant 0 : index
    %c0_0 = arith.constant 0 : index
    %0 = vector.load %arg1[%c0, %c0_0] : memref<16x128xf32, #tpu.memory_space<vmem>>, vector<16x128xf32>
    %c0_1 = arith.constant 0 : index
    %c0_2 = arith.constant 0 : index
    %1 = vector.load %arg2[%c0_1, %c0_2] : memref<128x128xf32, #tpu.memory_space<vmem>>, vector<128x128xf32>
    %cst = arith.constant dense<0.000000e+00> : vector<16x128xf32>
    %2 = tpu.matmul %0, %1, %cst {dimension_numbers = #tpu.dot_dimension_numbers<[1], [0], [0], [1], [0, 0, 1, 1], [], []>} : vector<16x128xf32>, vector<128x128xf32>, vector<16x128xf32> -> vector<16x128xf32>
    %3 = arith.addf %0, %2 : vector<16x128xf32>
    %c0_3 = arith.constant 0 : index
    %c0_4 = arith.constant 0 : index
    %4 = vector.load %arg3[%c0_3, %c0_4] : memref<1x128xf32, #tpu.memory_space<vmem>>, vector<1x128xf32>
    %5 = vector.broadcast %4 : vector<1x128xf32> to vector<16x128xf32>
    %6 = arith.addf %3, %5 : vector<16x128xf32>
    %cst_5 = arith.constant 0.00392156886 : f32
    %7 = vector.broadcast %cst_5 : f32 to vector<16x128xf32>
    %8 = arith.mulf %6, %7 : vector<16x128xf32>
    %c0_6 = arith.constant 0 : index
    %c0_7 = arith.constant 0 : index
    %9 = vector.load %arg4[%c0_6, %c0_7] : memref<16x128xf32, #tpu.memory_space<vmem>>, vector<16x128xf32>
    tpu.vector_store %arg4[%c0_6, %c0_7], %8 {strides = array<i32>} : memref<16x128xf32, #tpu.memory_space<vmem>>, vector<16x128xf32>,
    return
  }
  func.func @transform_0(%arg0: i32) -> (i32, i32) {
    %c0_i32 = arith.constant 0 : i32
    %c0_i32_0 = arith.constant 0 : i32
    return %arg0, %c0_i32 : i32, i32
  }
  func.func @transform_1(%arg0: i32) -> (i32, i32) {
    %c0_i32 = arith.constant 0 : i32
    %c0_i32_0 = arith.constant 0 : i32
    %c0_i32_1 = arith.constant 0 : i32
    return %c0_i32, %c0_i32_0 : i32, i32
  }
  func.func @transform_2(%arg0: i32) -> (i32, i32) {
    %c0_i32 = arith.constant 0 : i32
    %c0_i32_0 = arith.constant 0 : i32
    %c0_i32_1 = arith.constant 0 : i32
    return %c0_i32, %c0_i32_0 : i32, i32
  }
  func.func @transform_3(%arg0: i32) -> (i32, i32) {
    %c0_i32 = arith.constant 0 : i32
    %c0_i32_0 = arith.constant 0 : i32
    return %arg0, %c0_i32 : i32, i32
  }
}

</mosaic_0001>

<llo_original>
// kernel: tpu_custom_call.1
$region0: #{tpu_custom_call.1}
  #allocation0 [shape = 'u32[]', space=smem, size = 0x4, offset = 0x4, fixed_abs, tag = 'smem constant byte address 0x4 - core index']
  #allocation1 [shape = 'u32[72,128]{1,0:T(1,128)}', space=vmem, size = 0x9000, scoped, tag = 'internal scratch']
  %s0 = inlined_call_operand.hbm [shape: f32[16,128], index: 0, kind: input, shape index: {}]
  %s1 = inlined_call_operand.hbm [shape: f32[128,128], index: 1, kind: input, shape index: {}]
  %s2 = inlined_call_operand.vmem [shape: f32[1,128], index: 2, kind: input, shape index: {}]
  %s3 = inlined_call_operand.hbm [shape: f32[16,128], index: 3, kind: output, shape index: {}]
  %s4 = sld [smem:[#allocation0]]
  $region30: #{tpu_custom_call.1} parent=0
    _
  %s6 = ssub.s32 1, %s4
  %s7 = scalar_select 0, %s6, %s4
  $region1: #{tpu_custom_call.1} parent=0
    #allocation2 [shape = 'u8[8192]{0}', space=vmem, size = 0x2000, scoped, tag = 'input window, operand 0, single buffered']
    #allocation3 [shape = 's32[1]{0}', space=sflag, size = 0x4, scoped, tag = 'scoped memory for tpu_custom_call.1']
    #allocation4 [shape = 's32[1]{0}', space=sflag, size = 0x4, scoped, tag = 'scoped memory for tpu_custom_call.1']
    #allocation5 [shape = 'u8[65536]{0}', space=vmem, size = 0x10000, scoped, tag = 'input window, operand 1, single buffered']
    #allocation6 [shape = 's32[1]{0}', space=sflag, size = 0x4, scoped, tag = 'scoped memory for tpu_custom_call.1']
    #allocation7 [shape = 'u8[8192]{0}', space=vmem, size = 0x2000, scoped, tag = 'output window, operand 0, single buffered']
    %8 = vsyncpa [#allocation3], 0
    %9 = vsyncpa [#allocation6], 0
    %10 = vsyncpa [#allocation4], 0
    // Predicated region
    $region2: #{tpu_custom_call.1} parent=1 // pred_check
      _
    $region3: #{tpu_custom_call.1} parent=1 // pred_check_branch
      %12 = sbr.rel (0) target = $region5
    $region4: #{tpu_custom_call.1} parent=1 // pred_region
      %14 = vsyncadd [#allocation3], 0
      %s15 = sshll.u32 %s0, 4
      %s16 = int_to_ptr.hbm [resolvable:$true] %s15
      %s17 = sshll.u32 [#allocation2], 4
      %s18 = int_to_ptr.vmem [resolvable:$true] %s17
      %23 = dma.hbm_to_vmem [thread:$0]  %s16, 256, %s18, [#allocation3], 128, 128, 8
    $region5: #{tpu_custom_call.1} parent=1 // pred_fallthru
      _
    // Predicated region
    $region6: #{tpu_custom_call.1} parent=1 // pred_check
      _
    $region7: #{tpu_custom_call.1} parent=1 // pred_check_branch
      %25 = sbr.rel (0) target = $region9
    $region8: #{tpu_custom_call.1} parent=1 // pred_region
      %27 = vsyncadd [#allocation6], 0
      %s28 = sshll.u32 %s1, 4
      %s29 = int_to_ptr.hbm [resolvable:$true] %s28
      %s30 = sshll.u32 [#allocation5], 4
      %s31 = int_to_ptr.vmem [resolvable:$true] %s30
      %36 = dma.hbm_to_vmem [thread:$0]  %s29, 2048, %s31, [#allocation6], 128, 128, 8
    $region9: #{tpu_custom_call.1} parent=1 // pred_fallthru
      _
    // Predicated region
    $region10: #{tpu_custom_call.1} parent=1 // pred_check
      _
    $region11: #{tpu_custom_call.1} parent=1 // pred_check_branch
      %38 = sbr.rel (0) target = $region13
    $region12: #{tpu_custom_call.1} parent=1 // pred_region
      _
    $region13: #{tpu_custom_call.1} parent=1 // pred_fallthru
      _
    // Predicated region
    $region14: #{tpu_custom_call.1} parent=1 // pred_check
      _
    $region15: #{tpu_custom_call.1} parent=1 // pred_check_branch
      %40 = sbr.rel (0) target = $region17
    $region16: #{tpu_custom_call.1} parent=1 // pred_region
      %42 = dma.done [#allocation3], 256
    $region17: #{tpu_custom_call.1} parent=1 // pred_fallthru
      _
    // Predicated region
    $region18: #{tpu_custom_call.1} parent=1 // pred_check
      _
    $region19: #{tpu_custom_call.1} parent=1 // pred_check_branch
      %44 = sbr.rel (0) target = $region21
    $region20: #{tpu_custom_call.1} parent=1 // pred_region
      %46 = dma.done [#allocation6], 2048
    $region21: #{tpu_custom_call.1} parent=1 // pred_fallthru
      _
    %v47 = vld [vmem:[#allocation2] sm:$0xff]
    %v48 = vld [vmem:[#allocation2 + $0x8] sm:$0xff]
    %v49 = vld [vmem:[#allocation5] sm:$0xff]
    %v50 = vld [vmem:[#allocation5 + $0x8] sm:$0xff]
    %v51 = vld [vmem:[#allocation5 + $0x10] sm:$0xff]
    %v52 = vld [vmem:[#allocation5 + $0x18] sm:$0xff]
    %v53 = vld [vmem:[#allocation5 + $0x20] sm:$0xff]
    %v54 = vld [vmem:[#allocation5 + $0x28] sm:$0xff]
    %v55 = vld [vmem:[#allocation5 + $0x30] sm:$0xff]
    %v56 = vld [vmem:[#allocation5 + $0x38] sm:$0xff]
    %v57 = vld [vmem:[#allocation5 + $0x40] sm:$0xff]
    %v58 = vld [vmem:[#allocation5 + $0x48] sm:$0xff]
    %v59 = vld [vmem:[#allocation5 + $0x50] sm:$0xff]
    %v60 = vld [vmem:[#allocation5 + $0x58] sm:$0xff]
    %v61 = vld [vmem:[#allocation5 + $0x60] sm:$0xff]
    %v62 = vld [vmem:[#allocation5 + $0x68] sm:$0xff]
    %v63 = vld [vmem:[#allocation5 + $0x70] sm:$0xff]
    %v64 = vld [vmem:[#allocation5 + $0x78] sm:$0xff]
    %65 = vmatpush.msra.mxu0 %v64
    %66 = vmatpush.msra.mxu0 %v63
    %67 = vmatpush.msra.mxu0 %v62
    %68 = vmatpush.msra.mxu0 %v61
    %69 = vmatpush.msra.mxu0 %v60
    %70 = vmatpush.msra.mxu0 %v59
    %71 = vmatpush.msra.mxu0 %v58
    %72 = vmatpush.msra.mxu0 %v57
    %73 = vmatpush.msra.mxu0 %v56
    %74 = vmatpush.msra.mxu0 %v55
    %75 = vmatpush.msra.mxu0 %v54
    %76 = vmatpush.msra.mxu0 %v53
    %77 = vmatpush.msra.mxu0 %v52
    %78 = vmatpush.msra.mxu0 %v51
    %79 = vmatpush.msra.mxu0 %v50
    %80 = vmatpush.msra.mxu0 %v49
    %81 = vmatmul.f32.gmra.mxu0 %v47
    %v82 = vpop.f32.mrf.mxu0
    %v83 = vadd.f32 0.0, %v82
    %84 = vmatmul.f32.gmra.mxu0 %v48
    %v85 = vpop.f32.mrf.mxu0
    %v86 = vadd.f32 0.0, %v85
    %87 = vdwg.mxu0
    %v88 = vadd.f32 %v47, %v83
    %v89 = vadd.f32 %v48, %v86
    %v90 = vld [vmem:[%s2] sm:$0x1]
    %v92 = vperm.slane %v90, 0
    %v94 = vadd.f32 %v88, %v92
    %v95 = vadd.f32 %v89, %v92
    %v96 = vmul.f32 %v94, 0.003921569
    %v97 = vmul.f32 %v95, 0.003921569
    %98 = vst [vmem:[#allocation7] sm:$0xff] %v96
    %99 = vst [vmem:[#allocation7 + $0x8] sm:$0xff] %v97
    // Predicated region
    $region22: #{tpu_custom_call.1} parent=1 // pred_check
      _
    $region23: #{tpu_custom_call.1} parent=1 // pred_check_branch
      %101 = sbr.rel (0) target = $region25
    $region24: #{tpu_custom_call.1} parent=1 // pred_region
      %103 = vsyncadd [#allocation4], 0
      %s104 = sshll.u32 [#allocation7], 4
      %s105 = int_to_ptr.vmem [resolvable:$true] %s104
      %s106 = sshll.u32 %s3, 4
      %s107 = int_to_ptr.hbm [resolvable:$true] %s106
      %112 = dma.vmem_to_hbm [thread:$0]  %s105, 256, %s107, [#allocation4], 128, 128, 8
    $region25: #{tpu_custom_call.1} parent=1 // pred_fallthru
      _
    // Predicated region
    $region26: #{tpu_custom_call.1} parent=1 // pred_check
      _
    $region27: #{tpu_custom_call.1} parent=1 // pred_check_branch
      %114 = sbr.rel (0) target = $region29
    $region28: #{tpu_custom_call.1} parent=1 // pred_region
      %116 = dma.done [#allocation4], 256
    $region29: #{tpu_custom_call.1} parent=1 // pred_fallthru
      _
    %117 = vsyncpa [#allocation3], 1
    %118 = vsyncpa [#allocation6], 1
    %119 = vsyncpa [#allocation4], 1

</llo_original>
